<compile_context>
chip_gen: v5e
topology: v5e:2x2
jax: 0.10.0
libtpu: 0.0.40
codegen_flags: <defaults>
</compile_context>

<pallas_src>
import jax
import jax.numpy as jnp
from jax import lax
from jax.experimental import pallas as pl
from jax.experimental.pallas import tpu as pltpu


# ---------------------------------------------------------------------------
# Pallas kernel: in-kernel embedding gather + hoisted input projection +
# fused-gate GRU recurrence (trip count clamped to the tile's max length) +
# two FC layers.
# ---------------------------------------------------------------------------
def adjnoun_kernel(maxlen_ref,  # (num_tiles,) i32  SMEM (scalar prefetch)
                   tok_ref,     # (L, tb)      i32  token ids, time-major
                   len_ref,     # (tb, 1)      i32  per-row sequence lengths
                   tab_ref,     # (Vp, Hp)     bf16 embedding table
                   wih_ref,     # (Hp, 3*Hp)   bf16 [W_ir | W_iz | W_in]^T
                   whh_ref,     # (Hp, 3*Hp)   bf16 [W_hr | W_hz | W_hn]^T
                   bih_ref,     # (1, 3*Hp)    f32  [b_ir+b_hr | b_iz+b_hz | b_in]
                   bhn_ref,     # (1, Hp)      f32  b_hn (kept inside r*(...))
                   w1_ref,      # (Hp, Hp)     bf16 fc1 weight^T
                   b1_ref,      # (1, Hp)      f32  fc1 bias
                   w2_ref,      # (Hp, Op)     bf16 fc2 weight^T
                   b2_ref,      # (1, Op)      f32  fc2 bias
                   out_ref,     # (tb, Op)     f32
                   xproj_ref):  # (L, tb, 3*Hp) f32 scratch: hoisted x@W_ih + b
    L, TB = tok_ref.shape
    Vp, Hp = tab_ref.shape
    G = wih_ref.shape[1]                                   # 3 * Hp

    # ---- In-kernel embedding gather: one-hot matmul against the resident
    # table (exactly reproduces row selection; table values are bf16-rounded).
    tok = tok_ref[...]                                     # (L, TB) i32
    iota_v = lax.broadcasted_iota(jnp.int32, (L, TB, Vp), 2)
    onehot = (tok[:, :, None] == iota_v).astype(jnp.bfloat16)
    emb = jnp.dot(onehot.reshape(L * TB, Vp), tab_ref[...],
                  preferred_element_type=jnp.float32)      # (L*TB, Hp) f32

    # ---- Hoisted input-side projection for ALL timesteps: one MXU pass.
    # b_hr/b_hz are pre-folded into bih by the wrapper.
    xproj = jnp.dot(emb.astype(jnp.bfloat16), wih_ref[...],
                    preferred_element_type=jnp.float32) + bih_ref[...]
    xproj_ref[...] = xproj.reshape(L, TB, G)

    lens = len_ref[...]                                    # (TB, 1) i32
    bhn = bhn_ref[...]                                     # (1, Hp) f32

    def step(t, h):
        x_g = xproj_ref[t]                                 # (TB, 3*Hp) precomputed
        # Single fused recurrent matmul per step (bf16 operands, f32 accum).
        h_g = jnp.dot(h.astype(jnp.bfloat16), whh_ref[...],
                      preferred_element_type=jnp.float32)
        r = jax.nn.sigmoid(x_g[:, 0 * Hp:1 * Hp] + h_g[:, 0 * Hp:1 * Hp])
        z = jax.nn.sigmoid(x_g[:, 1 * Hp:2 * Hp] + h_g[:, 1 * Hp:2 * Hp])
        n = jnp.tanh(x_g[:, 2 * Hp:3 * Hp] + r * (h_g[:, 2 * Hp:3 * Hp] + bhn))
        h_new = (1.0 - z) * n + z * h
        # pack_padded_sequence semantics: freeze h once t >= length_row.
        return jnp.where(t < lens, h_new, h)

    # Clamp the recurrence to the tile's max length (skips fully padded steps).
    t_max = maxlen_ref[pl.program_id(0)]
    h0 = jnp.zeros((TB, Hp), jnp.float32)
    h_fin = lax.fori_loop(0, t_max, step, h0)

    r1 = jnp.maximum(
        jnp.dot(h_fin.astype(jnp.bfloat16), w1_ref[...],
                preferred_element_type=jnp.float32) + b1_ref[...], 0.0)
    r2 = jnp.maximum(
        jnp.dot(r1.astype(jnp.bfloat16), w2_ref[...],
                preferred_element_type=jnp.float32) + b2_ref[...], 0.0)
    out_ref[...] = r2.astype(out_ref.dtype)


# ---------------------------------------------------------------------------
# Wrapper: weight packing (bf16, padded, bias-folded), scalar-prefetched tile
# max-lengths, pallas_call with a (small) batch grid.
# ---------------------------------------------------------------------------
def _round_up(x, m):
    return ((x + m - 1) // m) * m


def _pad2(x, rows, cols):
    return jnp.pad(x, ((0, rows - x.shape[0]), (0, cols - x.shape[1])))


def _pack_params(params, Vp, Hp, Op):
    f32, bf16 = jnp.float32, jnp.bfloat16
    tab = _pad2(params["emb"].astype(f32), Vp, Hp).astype(bf16)
    wih = jnp.concatenate([_pad2(params["wih"][g], Hp, Hp) for g in range(3)],
                          axis=1).astype(bf16)
    whh = jnp.concatenate([_pad2(params["whh"][g], Hp, Hp) for g in range(3)],
                          axis=1).astype(bf16)
    # Fold b_hr, b_hz into the input-side bias; b_hn must stay separate
    # (it sits inside r * (W_hn h + b_hn) in the PyTorch GRU).
    bih = jnp.concatenate([
        _pad2(params["bih"][0] + params["bhh"][0], 1, Hp),
        _pad2(params["bih"][1] + params["bhh"][1], 1, Hp),
        _pad2(params["bih"][2], 1, Hp)], axis=1).astype(f32)
    bhn = _pad2(params["bhh"][2], 1, Hp).astype(f32)
    w1 = _pad2(params["w1"], Hp, Hp).astype(bf16)
    b1 = _pad2(params["b1"], 1, Hp).astype(f32)
    w2 = _pad2(params["w2"], Hp, Op).astype(bf16)
    b2 = _pad2(params["b2"], 1, Op).astype(f32)
    return tab, wih, whh, bih, bhn, w1, b1, w2, b2


def adjnoun_forward(input_batch, params, *, num_batch_tiles=1,
                    vmem_limit_bytes=48 * 1024 * 1024):
    # num_batch_tiles: 1 on v5e/v6e (single TensorCore, maximal tile); 2 on
    # v7x so the "parallel" batch grid shards across both TensorCores.
    B, L = input_batch.shape
    V, H = params["emb"].shape
    O = params["b2"].shape[-1]

    Bp = _round_up(B, 8 * num_batch_tiles)   # sublane-dense batch
    tb = Bp // num_batch_tiles               # one maximal tile per program
    # Tokens are kept time-major with batch on lanes; partial-batch tiles must
    # therefore be lane-aligned.
    assert num_batch_tiles == 1 or tb % 128 == 0, \
        "with num_batch_tiles > 1, the per-tile batch must be a multiple of 128"
    Hp = _round_up(H, 128)                   # lane-dense hidden
    Op = _round_up(O, 128)                   # lane-dense output (unmasked vst)
    Vp = _round_up(V, 128)                   # small-vocab, VMEM-resident table
    G = 3 * Hp

    tokens = jnp.transpose(input_batch.astype(jnp.int32), (1, 0))       # (L, B)
    tokens = jnp.pad(tokens, ((0, 0), (0, Bp - B)))                      # (L, Bp)

    seq_len = jnp.sum((input_batch > 0).astype(jnp.int32), axis=1)       # (B,)
    seq_len = jnp.pad(seq_len, (0, Bp - B))                              # (Bp,)
    tile_max = jnp.max(seq_len.reshape(num_batch_tiles, tb), axis=1)     # (T,)
    seq_len2 = seq_len.reshape(Bp, 1)                                    # (Bp, 1)

    tab, wih, whh, bih, bhn, w1, b1, w2, b2 = _pack_params(params, Vp, Hp, Op)

    def resident(shape):
        nd = len(shape)
        return pl.BlockSpec(shape, lambda b, ml, _nd=nd: (0,) * _nd)

    out = pl.pallas_call(
        adjnoun_kernel,
        out_shape=jax.ShapeDtypeStruct((Bp, Op), jnp.float32),
        grid_spec=pltpu.PrefetchScalarGridSpec(
            num_scalar_prefetch=1,                        # tile_max -> SMEM
            grid=(num_batch_tiles,),
            in_specs=[
                pl.BlockSpec((L, tb), lambda b, ml: (0, b)),    # tokens
                pl.BlockSpec((tb, 1), lambda b, ml: (b, 0)),    # lengths
                resident((Vp, Hp)),                             # embedding table
                resident((Hp, G)),                              # W_ih cat
                resident((Hp, G)),                              # W_hh cat
                resident((1, G)),                               # folded b_ih cat
                resident((1, Hp)),                              # b_hn
                resident((Hp, Hp)),                             # fc1 W^T
                resident((1, Hp)),                              # fc1 b
                resident((Hp, Op)),                             # fc2 W^T
                resident((1, Op)),                              # fc2 b
            ],
            out_specs=pl.BlockSpec((tb, Op), lambda b, ml: (b, 0)),
            scratch_shapes=[pltpu.VMEM((L, tb, G), jnp.float32)],
        ),
        compiler_params=pltpu.CompilerParams(
            dimension_semantics=("parallel",),
            vmem_limit_bytes=vmem_limit_bytes,
        ),
    )(tile_max, tokens, seq_len2, tab, wih, whh, bih, bhn, w1, b1, w2, b2)

    return out[:B, :O]


# ---------------------------------------------------------------------------
# Deterministic parameter init (mirrors module __init__ shapes).
# ---------------------------------------------------------------------------
def init_params(key, vocab_size, embedding_dim, hidden_dim, output_dim):
    # The module feeds embeddings into a GRU with input_size == hidden_dim,
    # so embedding_dim must equal hidden_dim for the forward to work.
    assert embedding_dim == hidden_dim
    ks = jax.random.split(key, 9)
    s = 1.0 / jnp.sqrt(hidden_dim)
    # NOTE: like the PyTorch module, .uniform_(-1,1) overwrites the padding row.
    emb = jax.random.uniform(ks[0], (vocab_size, embedding_dim), minval=-1.0, maxval=1.0)
    wih = jax.random.uniform(ks[1], (3, hidden_dim, hidden_dim), minval=-s, maxval=s)
    whh = jax.random.uniform(ks[2], (3, hidden_dim, hidden_dim), minval=-s, maxval=s)
    bih = jax.random.uniform(ks[3], (3, 1, hidden_dim), minval=-s, maxval=s)
    bhh = jax.random.uniform(ks[4], (3, 1, hidden_dim), minval=-s, maxval=s)
    w1 = jax.random.uniform(ks[5], (hidden_dim, hidden_dim), minval=-s, maxval=s)
    b1 = jax.random.uniform(ks[6], (1, hidden_dim), minval=-s, maxval=s)
    w2 = jax.random.uniform(ks[7], (hidden_dim, output_dim), minval=-s, maxval=s)
    b2 = jax.random.uniform(ks[8], (1, output_dim), minval=-s, maxval=s)
    return dict(emb=emb, wih=wih, whh=whh, bih=bih, bhh=bhh,
                w1=w1, b1=b1, w2=w2, b2=b2)


# ---------------------------------------------------------------------------
# Pure-JAX f32 reference (module math, unfused biases) for the check.
# ---------------------------------------------------------------------------
def reference_forward(input_batch, params):
    emb = jnp.take(params["emb"], input_batch, axis=0).astype(jnp.float32)  # (B, L, H)
    lengths = jnp.sum(input_batch > 0, axis=1)                              # (B,)
    B, L, H = emb.shape

    def step(t, h):
        x_t = emb[:, t, :]
        i_r = x_t @ params["wih"][0] + params["bih"][0]
        i_z = x_t @ params["wih"][1] + params["bih"][1]
        i_n = x_t @ params["wih"][2] + params["bih"][2]
        h_r = h @ params["whh"][0] + params["bhh"][0]
        h_z = h @ params["whh"][1] + params["bhh"][1]
        h_n = h @ params["whh"][2] + params["bhh"][2]
        r = jax.nn.sigmoid(i_r + h_r)
        z = jax.nn.sigmoid(i_z + h_z)
        n = jnp.tanh(i_n + r * h_n)
        h_new = (1.0 - z) * n + z * h
        mask = (t < lengths)[:, None].astype(jnp.float32)
        return mask * h_new + (1.0 - mask) * h

    h_fin = lax.fori_loop(0, L, step, jnp.zeros((B, H), jnp.float32))
    r1 = jnp.maximum(h_fin @ params["w1"] + params["b1"], 0.0)
    r2 = jnp.maximum(r1 @ params["w2"] + params["b2"], 0.0)
    return r2


if __name__ == "__main__":
    B, L = 4, 8                   # batch, max caption length
    V, E, H, O = 16, 32, 32, 32   # vocab, embedding(=hidden), hidden, output dims

    key = jax.random.PRNGKey(0)
    kp, kt = jax.random.split(key)
    params = init_params(kp, V, E, H, O)

    # Padded token batch (0 == padding), lengths sorted descending as
    # pack_padded_sequence(enforce_sorted=True) would require.
    tokens = jax.random.randint(kt, (B, L), 1, V)
    lengths = jnp.array([8, 6, 4, 2])
    pos = jnp.arange(L)[None, :]
    tokens = jnp.where(pos < lengths[:, None], tokens, 0).astype(jnp.int32)

    out = adjnoun_forward(tokens, params)
    out = jax.block_until_ready(out)

    ref = reference_forward(tokens, params)
    assert out.shape == (B, O)
    # Tolerance covers bf16 MXU operands in the kernel vs the pure-f32 reference.
    assert jnp.allclose(out, ref, atol=3e-2, rtol=3e-2)

    print("KERNEL_OK")
</pallas_src>

<mosaic_0001>
module attributes {stable_mosaic.version = 11 : i64} {
  func.func @adjnoun_kernel(%arg0: i32, %arg1: memref<1xi32, #tpu.memory_space<smem>>, %arg2: memref<8x8xi32, #tpu.memory_space<vmem>>, %arg3: memref<8x1xi32, #tpu.memory_space<vmem>>, %arg4: memref<128x128xbf16, #tpu.memory_space<vmem>>, %arg5: memref<128x384xbf16, #tpu.memory_space<vmem>>, %arg6: memref<128x384xbf16, #tpu.memory_space<vmem>>, %arg7: memref<1x384xf32, #tpu.memory_space<vmem>>, %arg8: memref<1x128xf32, #tpu.memory_space<vmem>>, %arg9: memref<128x128xbf16, #tpu.memory_space<vmem>>, %arg10: memref<1x128xf32, #tpu.memory_space<vmem>>, %arg11: memref<128x128xbf16, #tpu.memory_space<vmem>>, %arg12: memref<1x128xf32, #tpu.memory_space<vmem>>, %arg13: memref<8x128xf32, #tpu.memory_space<vmem>>, %arg14: memref<8x8x384xf32, #tpu.memory_space<vmem>>) attributes {dimension_semantics = [#tpu.dimension_semantics<parallel>], iteration_bounds = array<i64: 1>, scalar_prefetch = 1 : i64, scratch_operands = 1 : i64, tpu.core_type = #tpu.core_type<tc>, window_params = [{transform_indices = @transform_0, window_bounds = array<i64: 8, 8>}, {transform_indices = @transform_1, window_bounds = array<i64: 8, 1>}, {pipeline_mode = #tpu.pipeline_mode<synchronous>, transform_indices = @transform_2, window_bounds = array<i64: 128, 128>}, {pipeline_mode = #tpu.pipeline_mode<synchronous>, transform_indices = @transform_3, window_bounds = array<i64: 128, 384>}, {pipeline_mode = #tpu.pipeline_mode<synchronous>, transform_indices = @transform_4, window_bounds = array<i64: 128, 384>}, {pipeline_mode = #tpu.pipeline_mode<synchronous>, transform_indices = @transform_5, window_bounds = array<i64: 1, 384>}, {pipeline_mode = #tpu.pipeline_mode<synchronous>, transform_indices = @transform_6, window_bounds = array<i64: 1, 128>}, {pipeline_mode = #tpu.pipeline_mode<synchronous>, transform_indices = @transform_7, window_bounds = array<i64: 128, 128>}, {pipeline_mode = #tpu.pipeline_mode<synchronous>, transform_indices = @transform_8, window_bounds = array<i64: 1, 128>}, {pipeline_mode = #tpu.pipeline_mode<synchronous>, transform_indices = @transform_9, window_bounds = array<i64: 128, 128>}, {pipeline_mode = #tpu.pipeline_mode<synchronous>, transform_indices = @transform_10, window_bounds = array<i64: 1, 128>}, {transform_indices = @transform_11, window_bounds = array<i64: 8, 128>}]} {
    %c0 = arith.constant 0 : index
    %c0_0 = arith.constant 0 : index
    %0 = vector.load %arg2[%c0, %c0_0] : memref<8x8xi32, #tpu.memory_space<vmem>>, vector<8x8xi32>
    %1 = tpu.iota {dimensions = array<i32: 2>} : vector<8x8x128xi32>
    %2 = vector.shape_cast %0 : vector<8x8xi32> to vector<8x8x1xi32>
    %3 = vector.broadcast %2 : vector<8x8x1xi32> to vector<8x8x128xi32>
    %4 = arith.cmpi eq, %3, %1 : vector<8x8x128xi32>
    %5 = arith.extui %4 : vector<8x8x128xi1> to vector<8x8x128xi32>
    %6 = arith.sitofp %5 : vector<8x8x128xi32> to vector<8x8x128xf32>
    %7 = arith.truncf %6 : vector<8x8x128xf32> to vector<8x8x128xbf16>
    %8 = vector.shape_cast %7 : vector<8x8x128xbf16> to vector<64x128xbf16>
    %c0_1 = arith.constant 0 : index
    %c0_2 = arith.constant 0 : index
    %9 = vector.load %arg4[%c0_1, %c0_2] : memref<128x128xbf16, #tpu.memory_space<vmem>>, vector<128x128xbf16>
    %cst = arith.constant dense<0.000000e+00> : vector<64x128xf32>
    %10 = tpu.matmul %8, %9, %cst {dimension_numbers = #tpu.dot_dimension_numbers<[1], [0], [0], [1], [0, 0, 1, 1], [], []>} : vector<64x128xbf16>, vector<128x128xbf16>, vector<64x128xf32> -> vector<64x128xf32>
    %11 = arith.truncf %10 : vector<64x128xf32> to vector<64x128xbf16>
    %c0_3 = arith.constant 0 : index
    %c0_4 = arith.constant 0 : index
    %12 = vector.load %arg5[%c0_3, %c0_4] : memref<128x384xbf16, #tpu.memory_space<vmem>>, vector<128x384xbf16>
    %cst_5 = arith.constant dense<0.000000e+00> : vector<64x384xf32>
    %13 = tpu.matmul %11, %12, %cst_5 {dimension_numbers = #tpu.dot_dimension_numbers<[1], [0], [0], [1], [0, 0, 1, 1], [], []>} : vector<64x128xbf16>, vector<128x384xbf16>, vector<64x384xf32> -> vector<64x384xf32>
    %c0_6 = arith.constant 0 : index
    %c0_7 = arith.constant 0 : index
    %14 = vector.load %arg7[%c0_6, %c0_7] : memref<1x384xf32, #tpu.memory_space<vmem>>, vector<1x384xf32>
    %15 = vector.broadcast %14 : vector<1x384xf32> to vector<64x384xf32>
    %16 = arith.addf %13, %15 : vector<64x384xf32>
    %17 = vector.shape_cast %16 : vector<64x384xf32> to vector<8x8x384xf32>
    %c0_8 = arith.constant 0 : index
    %c0_9 = arith.constant 0 : index
    %c0_10 = arith.constant 0 : index
    %18 = vector.load %arg14[%c0_8, %c0_9, %c0_10] : memref<8x8x384xf32, #tpu.memory_space<vmem>>, vector<8x8x384xf32>
    tpu.vector_store %arg14[%c0_8, %c0_9, %c0_10], %17 {strides = array<i32>} : memref<8x8x384xf32, #tpu.memory_space<vmem>>, vector<8x8x384xf32>,
    %c0_11 = arith.constant 0 : index
    %c0_12 = arith.constant 0 : index
    %19 = vector.load %arg3[%c0_11, %c0_12] : memref<8x1xi32, #tpu.memory_space<vmem>>, vector<8x1xi32>
    %c0_13 = arith.constant 0 : index
    %c0_14 = arith.constant 0 : index
    %20 = vector.load %arg8[%c0_13, %c0_14] : memref<1x128xf32, #tpu.memory_space<vmem>>, vector<1x128xf32>
    %21 = arith.index_cast %arg0 : i32 to index
    %22 = memref.load %arg1[%21] : memref<1xi32, #tpu.memory_space<smem>>
    %cst_15 = arith.constant 0.000000e+00 : f32
    %23 = vector.broadcast %cst_15 : f32 to vector<8x128xf32>
    %c0_i32 = arith.constant 0 : i32
    %24 = arith.subi %22, %c0_i32 : i32
    %25 = arith.addi %c0_i32, %24 : i32
    %c1_i32 = arith.constant 1 : i32
    %26 = scf.for %arg15 = %c0_i32 to %25 step %c1_i32 iter_args(%arg16 = %23) -> (vector<8x128xf32>)  : i32 {
      %44 = arith.index_cast %arg15 : i32 to index
      %c0_30 = arith.constant 0 : index
      %c0_31 = arith.constant 0 : index
      %45 = vector.load %arg14[%44, %c0_30, %c0_31] : memref<8x8x384xf32, #tpu.memory_space<vmem>>, vector<1x8x384xf32>
      %46 = vector.shape_cast %45 : vector<1x8x384xf32> to vector<8x384xf32>
      %47 = arith.truncf %arg16 : vector<8x128xf32> to vector<8x128xbf16>
      %c0_32 = arith.constant 0 : index
      %c0_33 = arith.constant 0 : index
      %48 = vector.load %arg6[%c0_32, %c0_33] : memref<128x384xbf16, #tpu.memory_space<vmem>>, vector<128x384xbf16>
      %cst_34 = arith.constant dense<0.000000e+00> : vector<8x384xf32>
      %49 = tpu.matmul %47, %48, %cst_34 {dimension_numbers = #tpu.dot_dimension_numbers<[1], [0], [0], [1], [0, 0, 1, 1], [], []>} : vector<8x128xbf16>, vector<128x384xbf16>, vector<8x384xf32> -> vector<8x384xf32>
      %50 = vector.extract_strided_slice %46 {offsets = [0, 0], sizes = [8, 128], strides = [1, 1]} : vector<8x384xf32> to vector<8x128xf32>
      %51 = vector.extract_strided_slice %49 {offsets = [0, 0], sizes = [8, 128], strides = [1, 1]} : vector<8x384xf32> to vector<8x128xf32>
      %52 = arith.addf %50, %51 : vector<8x128xf32>
      %53 = arith.negf %52 : vector<8x128xf32>
      %54 = math.exp %53 : vector<8x128xf32>
      %cst_35 = arith.constant 1.000000e+00 : f32
      %55 = vector.broadcast %cst_35 : f32 to vector<8x128xf32>
      %56 = arith.addf %55, %54 : vector<8x128xf32>
      %57 = arith.divf %55, %56 : vector<8x128xf32>
      %58 = vector.extract_strided_slice %46 {offsets = [0, 128], sizes = [8, 128], strides = [1, 1]} : vector<8x384xf32> to vector<8x128xf32>
      %59 = vector.extract_strided_slice %49 {offsets = [0, 128], sizes = [8, 128], strides = [1, 1]} : vector<8x384xf32> to vector<8x128xf32>
      %60 = arith.addf %58, %59 : vector<8x128xf32>
      %61 = arith.negf %60 : vector<8x128xf32>
      %62 = math.exp %61 : vector<8x128xf32>
      %cst_36 = arith.constant 1.000000e+00 : f32
      %63 = vector.broadcast %cst_36 : f32 to vector<8x128xf32>
      %64 = arith.addf %63, %62 : vector<8x128xf32>
      %65 = arith.divf %63, %64 : vector<8x128xf32>
      %66 = vector.extract_strided_slice %46 {offsets = [0, 256], sizes = [8, 128], strides = [1, 1]} : vector<8x384xf32> to vector<8x128xf32>
      %67 = vector.extract_strided_slice %49 {offsets = [0, 256], sizes = [8, 128], strides = [1, 1]} : vector<8x384xf32> to vector<8x128xf32>
      %68 = vector.broadcast %20 : vector<1x128xf32> to vector<8x128xf32>
      %69 = arith.addf %67, %68 : vector<8x128xf32>
      %70 = arith.mulf %57, %69 : vector<8x128xf32>
      %71 = arith.addf %66, %70 : vector<8x128xf32>
      %72 = math.tanh %71 : vector<8x128xf32>
      %cst_37 = arith.constant 1.000000e+00 : f32
      %73 = vector.broadcast %cst_37 : f32 to vector<8x128xf32>
      %74 = arith.subf %73, %65 : vector<8x128xf32>
      %75 = arith.mulf %74, %72 : vector<8x128xf32>
      %76 = arith.mulf %65, %arg16 : vector<8x128xf32>
      %77 = arith.addf %75, %76 : vector<8x128xf32>
      %78 = vector.broadcast %arg15 : i32 to vector<8x1xi32>
      %79 = arith.cmpi slt, %78, %19 : vector<8x1xi32>
      %80 = vector.shape_cast %79 : vector<8x1xi1> to vector<8x1xi1>
      %81 = vector.broadcast %80 : vector<8x1xi1> to vector<8x128xi1>
      %82 = arith.select %81, %77, %arg16 : vector<8x128xi1>, vector<8x128xf32>
      scf.yield %82 : vector<8x128xf32>
    }
    %27 = arith.truncf %26 : vector<8x128xf32> to vector<8x128xbf16>
    %c0_16 = arith.constant 0 : index
    %c0_17 = arith.constant 0 : index
    %28 = vector.load %arg9[%c0_16, %c0_17] : memref<128x128xbf16, #tpu.memory_space<vmem>>, vector<128x128xbf16>
    %cst_18 = arith.constant dense<0.000000e+00> : vector<8x128xf32>
    %29 = tpu.matmul %27, %28, %cst_18 {dimension_numbers = #tpu.dot_dimension_numbers<[1], [0], [0], [1], [0, 0, 1, 1], [], []>} : vector<8x128xbf16>, vector<128x128xbf16>, vector<8x128xf32> -> vector<8x128xf32>
    %c0_19 = arith.constant 0 : index
    %c0_20 = arith.constant 0 : index
    %30 = vector.load %arg10[%c0_19, %c0_20] : memref<1x128xf32, #tpu.memory_space<vmem>>, vector<1x128xf32>
    %31 = vector.broadcast %30 : vector<1x128xf32> to vector<8x128xf32>
    %32 = arith.addf %29, %31 : vector<8x128xf32>
    %cst_21 = arith.constant 0.000000e+00 : f32
    %33 = vector.broadcast %cst_21 : f32 to vector<8x128xf32>
    %34 = arith.maximumf %32, %33 : vector<8x128xf32>
    %35 = arith.truncf %34 : vector<8x128xf32> to vector<8x128xbf16>
    %c0_22 = arith.constant 0 : index
    %c0_23 = arith.constant 0 : index
    %36 = vector.load %arg11[%c0_22, %c0_23] : memref<128x128xbf16, #tpu.memory_space<vmem>>, vector<128x128xbf16>
    %cst_24 = arith.constant dense<0.000000e+00> : vector<8x128xf32>
    %37 = tpu.matmul %35, %36, %cst_24 {dimension_numbers = #tpu.dot_dimension_numbers<[1], [0], [0], [1], [0, 0, 1, 1], [], []>} : vector<8x128xbf16>, vector<128x128xbf16>, vector<8x128xf32> -> vector<8x128xf32>
    %c0_25 = arith.constant 0 : index
    %c0_26 = arith.constant 0 : index
    %38 = vector.load %arg12[%c0_25, %c0_26] : memref<1x128xf32, #tpu.memory_space<vmem>>, vector<1x128xf32>
    %39 = vector.broadcast %38 : vector<1x128xf32> to vector<8x128xf32>
    %40 = arith.addf %37, %39 : vector<8x128xf32>
    %cst_27 = arith.constant 0.000000e+00 : f32
    %41 = vector.broadcast %cst_27 : f32 to vector<8x128xf32>
    %42 = arith.maximumf %40, %41 : vector<8x128xf32>
    %c0_28 = arith.constant 0 : index
    %c0_29 = arith.constant 0 : index
    %43 = vector.load %arg13[%c0_28, %c0_29] : memref<8x128xf32, #tpu.memory_space<vmem>>, vector<8x128xf32>
    tpu.vector_store %arg13[%c0_28, %c0_29], %42 {strides = array<i32>} : memref<8x128xf32, #tpu.memory_space<vmem>>, vector<8x128xf32>,
    return
  }
  func.func @transform_0(%arg0: i32, %arg1: memref<1xi32, #tpu.memory_space<smem>>) -> (i32, i32) {
    %c0_i32 = arith.constant 0 : i32
    %c0_i32_0 = arith.constant 0 : i32
    return %c0_i32, %arg0 : i32, i32
  }
  func.func @transform_1(%arg0: i32, %arg1: memref<1xi32, #tpu.memory_space<smem>>) -> (i32, i32) {
    %c0_i32 = arith.constant 0 : i32
    %c0_i32_0 = arith.constant 0 : i32
    return %arg0, %c0_i32 : i32, i32
  }
  func.func @transform_2(%arg0: i32, %arg1: memref<1xi32, #tpu.memory_space<smem>>) -> (i32, i32) {
    %c0_i32 = arith.constant 0 : i32
    %c0_i32_0 = arith.constant 0 : i32
    %c0_i32_1 = arith.constant 0 : i32
    return %c0_i32, %c0_i32_0 : i32, i32
  }
  func.func @transform_3(%arg0: i32, %arg1: memref<1xi32, #tpu.memory_space<smem>>) -> (i32, i32) {
    %c0_i32 = arith.constant 0 : i32
    %c0_i32_0 = arith.constant 0 : i32
    %c0_i32_1 = arith.constant 0 : i32
    return %c0_i32, %c0_i32_0 : i32, i32
  }
  func.func @transform_4(%arg0: i32, %arg1: memref<1xi32, #tpu.memory_space<smem>>) -> (i32, i32) {
    %c0_i32 = arith.constant 0 : i32
    %c0_i32_0 = arith.constant 0 : i32
    %c0_i32_1 = arith.constant 0 : i32
    return %c0_i32, %c0_i32_0 : i32, i32
  }
  func.func @transform_5(%arg0: i32, %arg1: memref<1xi32, #tpu.memory_space<smem>>) -> (i32, i32) {
    %c0_i32 = arith.constant 0 : i32
    %c0_i32_0 = arith.constant 0 : i32
    %c0_i32_1 = arith.constant 0 : i32
    return %c0_i32, %c0_i32_0 : i32, i32
  }
  func.func @transform_6(%arg0: i32, %arg1: memref<1xi32, #tpu.memory_space<smem>>) -> (i32, i32) {
    %c0_i32 = arith.constant 0 : i32
    %c0_i32_0 = arith.constant 0 : i32
    %c0_i32_1 = arith.constant 0 : i32
    return %c0_i32, %c0_i32_0 : i32, i32
  }
  func.func @transform_7(%arg0: i32, %arg1: memref<1xi32, #tpu.memory_space<smem>>) -> (i32, i32) {
    %c0_i32 = arith.constant 0 : i32
    %c0_i32_0 = arith.constant 0 : i32
    %c0_i32_1 = arith.constant 0 : i32
    return %c0_i32, %c0_i32_0 : i32, i32
  }
  func.func @transform_8(%arg0: i32, %arg1: memref<1xi32, #tpu.memory_space<smem>>) -> (i32, i32) {
    %c0_i32 = arith.constant 0 : i32
    %c0_i32_0 = arith.constant 0 : i32
    %c0_i32_1 = arith.constant 0 : i32
    return %c0_i32, %c0_i32_0 : i32, i32
  }
  func.func @transform_9(%arg0: i32, %arg1: memref<1xi32, #tpu.memory_space<smem>>) -> (i32, i32) {
    %c0_i32 = arith.constant 0 : i32
    %c0_i32_0 = arith.constant 0 : i32
    %c0_i32_1 = arith.constant 0 : i32
    return %c0_i32, %c0_i32_0 : i32, i32
  }
  func.func @transform_10(%arg0: i32, %arg1: memref<1xi32, #tpu.memory_space<smem>>) -> (i32, i32) {
    %c0_i32 = arith.constant 0 : i32
    %c0_i32_0 = arith.constant 0 : i32
    %c0_i32_1 = arith.constant 0 : i32
    return %c0_i32, %c0_i32_0 : i32, i32
  }
  func.func @transform_11(%arg0: i32, %arg1: memref<1xi32, #tpu.memory_space<smem>>) -> (i32, i32) {
    %c0_i32 = arith.constant 0 : i32
    %c0_i32_0 = arith.constant 0 : i32
    return %arg0, %c0_i32 : i32, i32
  }
}

</mosaic_0001>

<llo_original>
// kernel: tpu_custom_call.1
$region0: #{tpu_custom_call.1}
  #allocation0 [shape = 'u32[]', space=smem, size = 0x4, offset = 0x4, fixed_abs, tag = 'smem constant byte address 0x4 - core index']
  #allocation1 [shape = 'u32[72,128]{1,0:T(1,128)}', space=vmem, size = 0x9000, scoped, tag = 'internal scratch']
  #allocation2 [shape = 'f32[8,8,384]{2,1,0:T(8,128)}', space=vmem, size = 0x18000, scoped, tag = 'scratch operand']
  #allocation3 [shape = 's32[1]{0}', space=sflag, size = 0x4, scoped, tag = 'scoped memory for tpu_custom_call.1']
  #allocation4 [shape = 's32[1]{0:T(128)S(6)}', space=smem, size = 0x200, scoped, tag = 'prefetched SMEM operand 0']
  %s0 = inlined_call_operand.<no memory space> [shape: s32[1], index: 0, kind: input, shape index: {}]
  %s1 = inlined_call_operand.vmem [shape: s32[8,8], index: 1, kind: input, shape index: {}]
  %s2 = inlined_call_operand.vmem [shape: s32[8,1], index: 2, kind: input, shape index: {}]
  %s3 = inlined_call_operand.hbm [shape: bf16[128,128], index: 3, kind: input, shape index: {}]
  %s4 = inlined_call_operand.hbm [shape: bf16[128,384], index: 4, kind: input, shape index: {}]
  %s5 = inlined_call_operand.hbm [shape: bf16[128,384], index: 5, kind: input, shape index: {}]
  %s6 = inlined_call_operand.vmem [shape: f32[1,384], index: 6, kind: input, shape index: {}]
  %s7 = inlined_call_operand.vmem [shape: f32[1,128], index: 7, kind: input, shape index: {}]
  %s8 = inlined_call_operand.hbm [shape: bf16[128,128], index: 8, kind: input, shape index: {}]
  %s9 = inlined_call_operand.vmem [shape: f32[1,128], index: 9, kind: input, shape index: {}]
  %s10 = inlined_call_operand.hbm [shape: bf16[128,128], index: 10, kind: input, shape index: {}]
  %s11 = inlined_call_operand.vmem [shape: f32[1,128], index: 11, kind: input, shape index: {}]
  %s12 = inlined_call_operand.hbm [shape: f32[8,128], index: 12, kind: output, shape index: {}]
  %s13 = sld [smem:[#allocation0]]
  $region81: #{tpu_custom_call.1} parent=0
    _
  %s15 = ssub.s32 1, %s13
  %s16 = scalar_select 0, %s15, %s13
  %17 = sst [smem:[#allocation4]] %s0
  $region1: #{tpu_custom_call.1} parent=0
    #allocation5 [shape = 'u8[32768]{0}', space=vmem, size = 0x8000, scoped, tag = 'input window, operand 3, single buffered']
    #allocation6 [shape = 's32[1]{0}', space=sflag, size = 0x4, scoped, tag = 'scoped memory for tpu_custom_call.1']
    #allocation7 [shape = 's32[1]{0}', space=sflag, size = 0x4, scoped, tag = 'scoped memory for tpu_custom_call.1']
    #allocation8 [shape = 'u8[98304]{0}', space=vmem, size = 0x18000, scoped, tag = 'input window, operand 4, single buffered']
    #allocation9 [shape = 's32[1]{0}', space=sflag, size = 0x4, scoped, tag = 'scoped memory for tpu_custom_call.1']
    #allocation10 [shape = 'u8[98304]{0}', space=vmem, size = 0x18000, scoped, tag = 'input window, operand 5, single buffered']
    #allocation11 [shape = 'u8[32768]{0}', space=vmem, size = 0x8000, scoped, tag = 'input window, operand 8, single buffered']
    #allocation12 [shape = 's32[1]{0}', space=sflag, size = 0x4, scoped, tag = 'scoped memory for tpu_custom_call.1']
    #allocation13 [shape = 'u8[32768]{0}', space=vmem, size = 0x8000, scoped, tag = 'input window, operand 10, single buffered']
    #allocation14 [shape = 'u8[4096]{0}', space=vmem, size = 0x1000, scoped, tag = 'output window, operand 0, single buffered']
    %18 = vsyncpa [#allocation6], 0
    %19 = vsyncpa [#allocation9], 0
    %20 = vsyncpa [#allocation12], 0
    %21 = vsyncpa [#allocation7], 0
    // Predicated region
    $region2: #{tpu_custom_call.1} parent=1 // pred_check
      _
    $region3: #{tpu_custom_call.1} parent=1 // pred_check_branch
      %23 = sbr.rel (0) target = $region5
    $region4: #{tpu_custom_call.1} parent=1 // pred_region
      _
    $region5: #{tpu_custom_call.1} parent=1 // pred_fallthru
      _
    // Predicated region
    $region6: #{tpu_custom_call.1} parent=1 // pred_check
      _
    $region7: #{tpu_custom_call.1} parent=1 // pred_check_branch
      %25 = sbr.rel (0) target = $region9
    $region8: #{tpu_custom_call.1} parent=1 // pred_region
      _
    $region9: #{tpu_custom_call.1} parent=1 // pred_fallthru
      _
    // Predicated region
    $region10: #{tpu_custom_call.1} parent=1 // pred_check
      _
    $region11: #{tpu_custom_call.1} parent=1 // pred_check_branch
      %27 = sbr.rel (0) target = $region13
    $region12: #{tpu_custom_call.1} parent=1 // pred_region
      %29 = vsyncadd [#allocation6], 0
      %s30 = sshll.u32 %s3, 4
      %s31 = int_to_ptr.hbm [resolvable:$true] %s30
      %s32 = sshll.u32 [#allocation5], 4
      %s33 = int_to_ptr.vmem [resolvable:$true] %s32
      %38 = dma.hbm_to_vmem [thread:$0]  %s31, 1024, %s33, [#allocation6], 64, 64, 4
    $region13: #{tpu_custom_call.1} parent=1 // pred_fallthru
      _
    // Predicated region
    $region14: #{tpu_custom_call.1} parent=1 // pred_check
      _
    $region15: #{tpu_custom_call.1} parent=1 // pred_check_branch
      %40 = sbr.rel (0) target = $region17
    $region16: #{tpu_custom_call.1} parent=1 // pred_region
      %42 = vsyncadd [#allocation9], 0
      %s43 = sshll.u32 %s4, 4
      %s44 = int_to_ptr.hbm [resolvable:$true] %s43
      %s45 = sshll.u32 [#allocation8], 4
      %s46 = int_to_ptr.vmem [resolvable:$true] %s45
      %51 = dma.hbm_to_vmem [thread:$0]  %s44, 3072, %s46, [#allocation9], 192, 192, 12
    $region17: #{tpu_custom_call.1} parent=1 // pred_fallthru
      _
    // Predicated region
    $region18: #{tpu_custom_call.1} parent=1 // pred_check
      _
    $region19: #{tpu_custom_call.1} parent=1 // pred_check_branch
      %53 = sbr.rel (0) target = $region21
    $region20: #{tpu_custom_call.1} parent=1 // pred_region
      %55 = vsyncadd [#allocation9], 0
      %s56 = sshll.u32 %s5, 4
      %s57 = int_to_ptr.hbm [resolvable:$true] %s56
      %s58 = sshll.u32 [#allocation10], 4
      %s59 = int_to_ptr.vmem [resolvable:$true] %s58
      %64 = dma.hbm_to_vmem [thread:$0]  %s57, 3072, %s59, [#allocation9], 192, 192, 12
    $region21: #{tpu_custom_call.1} parent=1 // pred_fallthru
      _
    // Predicated region
    $region22: #{tpu_custom_call.1} parent=1 // pred_check
      _
    $region23: #{tpu_custom_call.1} parent=1 // pred_check_branch
      %66 = sbr.rel (0) target = $region25
    $region24: #{tpu_custom_call.1} parent=1 // pred_region
      _
    $region25: #{tpu_custom_call.1} parent=1 // pred_fallthru
      _
    // Predicated region
    $region26: #{tpu_custom_call.1} parent=1 // pred_check
      _
    $region27: #{tpu_custom_call.1} parent=1 // pred_check_branch
      %68 = sbr.rel (0) target = $region29
    $region28: #{tpu_custom_call.1} parent=1 // pred_region
      _
    $region29: #{tpu_custom_call.1} parent=1 // pred_fallthru
      _
    // Predicated region
    $region30: #{tpu_custom_call.1} parent=1 // pred_check
      _
    $region31: #{tpu_custom_call.1} parent=1 // pred_check_branch
      %70 = sbr.rel (0) target = $region33
    $region32: #{tpu_custom_call.1} parent=1 // pred_region
      %72 = vsyncadd [#allocation12], 0
      %s73 = sshll.u32 %s8, 4
      %s74 = int_to_ptr.hbm [resolvable:$true] %s73
      %s75 = sshll.u32 [#allocation11], 4
      %s76 = int_to_ptr.vmem [resolvable:$true] %s75
      %81 = dma.hbm_to_vmem [thread:$0]  %s74, 1024, %s76, [#allocation12], 64, 64, 4
    $region33: #{tpu_custom_call.1} parent=1 // pred_fallthru
      _
    // Predicated region
    $region34: #{tpu_custom_call.1} parent=1 // pred_check
      _
    $region35: #{tpu_custom_call.1} parent=1 // pred_check_branch
      %83 = sbr.rel (0) target = $region37
    $region36: #{tpu_custom_call.1} parent=1 // pred_region
      _
    $region37: #{tpu_custom_call.1} parent=1 // pred_fallthru
      _
    // Predicated region
    $region38: #{tpu_custom_call.1} parent=1 // pred_check
      _
    $region39: #{tpu_custom_call.1} parent=1 // pred_check_branch
      %85 = sbr.rel (0) target = $region41
    $region40: #{tpu_custom_call.1} parent=1 // pred_region
      %87 = vsyncadd [#allocation12], 0
      %s88 = sshll.u32 %s10, 4
      %s89 = int_to_ptr.hbm [resolvable:$true] %s88
      %s90 = sshll.u32 [#allocation13], 4
      %s91 = int_to_ptr.vmem [resolvable:$true] %s90
      %96 = dma.hbm_to_vmem [thread:$0]  %s89, 1024, %s91, [#allocation12], 64, 64, 4
    $region41: #{tpu_custom_call.1} parent=1 // pred_fallthru
      _
    // Predicated region
    $region42: #{tpu_custom_call.1} parent=1 // pred_check
      _
    $region43: #{tpu_custom_call.1} parent=1 // pred_check_branch
      %98 = sbr.rel (0) target = $region45
    $region44: #{tpu_custom_call.1} parent=1 // pred_region
      _
    $region45: #{tpu_custom_call.1} parent=1 // pred_fallthru
      _
    // Predicated region
    $region46: #{tpu_custom_call.1} parent=1 // pred_check
      _
    $region47: #{tpu_custom_call.1} parent=1 // pred_check_branch
      %100 = sbr.rel (0) target = $region49
    $region48: #{tpu_custom_call.1} parent=1 // pred_region
      %102 = dma.done [#allocation6], 1024
    $region49: #{tpu_custom_call.1} parent=1 // pred_fallthru
      _
    // Predicated region
    $region50: #{tpu_custom_call.1} parent=1 // pred_check
      _
    $region51: #{tpu_custom_call.1} parent=1 // pred_check_branch
      %104 = sbr.rel (0) target = $region53
    $region52: #{tpu_custom_call.1} parent=1 // pred_region
      %106 = dma.done [#allocation9], 3072
    $region53: #{tpu_custom_call.1} parent=1 // pred_fallthru
      _
    // Predicated region
    $region54: #{tpu_custom_call.1} parent=1 // pred_check
      _
    $region55: #{tpu_custom_call.1} parent=1 // pred_check_branch
      %108 = sbr.rel (0) target = $region57
    $region56: #{tpu_custom_call.1} parent=1 // pred_region
      %110 = dma.done [#allocation9], 3072
    $region57: #{tpu_custom_call.1} parent=1 // pred_fallthru
      _
    // Predicated region
    $region58: #{tpu_custom_call.1} parent=1 // pred_check
      _
    $region59: #{tpu_custom_call.1} parent=1 // pred_check_branch
      %112 = sbr.rel (0) target = $region61
    $region60: #{tpu_custom_call.1} parent=1 // pred_region
      %114 = dma.done [#allocation12], 1024
    $region61: #{tpu_custom_call.1} parent=1 // pred_fallthru
      _
    // Predicated region
    $region62: #{tpu_custom_call.1} parent=1 // pred_check
      _
    $region63: #{tpu_custom_call.1} parent=1 // pred_check_branch
      %116 = sbr.rel (0) target = $region65
    $region64: #{tpu_custom_call.1} parent=1 // pred_region
      %118 = dma.done [#allocation12], 1024
    $region65: #{tpu_custom_call.1} parent=1 // pred_fallthru
      _
    %v119 = vld [vmem:[%s1] sm:$0xff]
    %v120 = vlaneseq
    %v121 = vand.u32 %v120, 127
    %v122 = vperm.slane %v119, 0
    %v123 = vlaneseq
    %v124 = vshrl.u32 %v123, 7
    %126 = vset.pattern.permute.xlu0 %v124
    %127 = vperm.xlu0 %126, %v122
    %v128 = vpop.permute.xlu0 %127
    %v129 = vperm.slane %v119, 1
    %v130 = vlaneseq
    %v131 = vshrl.u32 %v130, 7
    %133 = vset.pattern.permute.xlu0 %v131
    %134 = vperm.xlu0 %133, %v129
    %v135 = vpop.permute.xlu0 %134
    %v136 = vperm.slane %v119, 2
    %v137 = vlaneseq
    %v138 = vshrl.u32 %v137, 7
    %140 = vset.pattern.permute.xlu0 %v138
    %141 = vperm.xlu0 %140, %v136
    %v142 = vpop.permute.xlu0 %141
    %v143 = vperm.slane %v119, 3
    %v144 = vlaneseq
    %v145 = vshrl.u32 %v144, 7
    %147 = vset.pattern.permute.xlu0 %v145
    %148 = vperm.xlu0 %147, %v143
    %v149 = vpop.permute.xlu0 %148
    %v150 = vperm.slane %v119, 4
    %v151 = vlaneseq
    %v152 = vshrl.u32 %v151, 7
    %154 = vset.pattern.permute.xlu0 %v152
    %155 = vperm.xlu0 %154, %v150
    %v156 = vpop.permute.xlu0 %155
    %v157 = vperm.slane %v119, 5
    %v158 = vlaneseq
    %v159 = vshrl.u32 %v158, 7
    %161 = vset.pattern.permute.xlu0 %v159
    %162 = vperm.xlu0 %161, %v157
    %v163 = vpop.permute.xlu0 %162
    %v164 = vperm.slane %v119, 6
    %v165 = vlaneseq
    %v166 = vshrl.u32 %v165, 7
    %168 = vset.pattern.permute.xlu0 %v166
    %169 = vperm.xlu0 %168, %v164
    %v170 = vpop.permute.xlu0 %169
    %v171 = vperm.slane %v119, 7
    %v172 = vlaneseq
    %v173 = vshrl.u32 %v172, 7
    %175 = vset.pattern.permute.xlu0 %v173
    %176 = vperm.xlu0 %175, %v171
    %v177 = vpop.permute.xlu0 %176
    %vm178 = vcmp.eq.s32.totalorder %v128, %v121
    %vm179 = vcmp.eq.s32.totalorder %v135, %v121
    %vm180 = vcmp.eq.s32.totalorder %v142, %v121
    %vm181 = vcmp.eq.s32.totalorder %v149, %v121
    %vm182 = vcmp.eq.s32.totalorder %v156, %v121
    %vm183 = vcmp.eq.s32.totalorder %v163, %v121
    %vm184 = vcmp.eq.s32.totalorder %v170, %v121
    %vm185 = vcmp.eq.s32.totalorder %v177, %v121
    %v186 = vsel %vm178, 1, 0
    %v187 = vsel %vm179, 1, 0
    %v188 = vsel %vm180, 1, 0
    %v189 = vsel %vm181, 1, 0
    %v190 = vsel %vm182, 1, 0
    %v191 = vsel %vm183, 1, 0
    %v192 = vsel %vm184, 1, 0
    %v193 = vsel %vm185, 1, 0
    %v194 = vcvt.s32.f32 %v186
    %v195 = vcvt.s32.f32 %v187
    %v196 = vcvt.s32.f32 %v188
    %v197 = vcvt.s32.f32 %v189
    %v198 = vcvt.s32.f32 %v190
    %v199 = vcvt.s32.f32 %v191
    %v200 = vcvt.s32.f32 %v192
    %v201 = vcvt.s32.f32 %v193
    %v202 = vpack.c.bf16 %v194, %v194
    %v203 = vpack.c.bf16 %v195, %v195
    %v204 = vpack.c.bf16 %v196, %v196
    %v205 = vpack.c.bf16 %v197, %v197
    %v206 = vpack.c.bf16 %v198, %v198
    %v207 = vpack.c.bf16 %v199, %v199
    %v208 = vpack.c.bf16 %v200, %v200
    %v209 = vpack.c.bf16 %v201, %v201
    %v210 = vld [vmem:[#allocation5] sm:$0xf]
    %v211 = vld [vmem:[#allocation5 + $0x4] sm:$0xf]
    %v212 = vld [vmem:[#allocation5 + $0x8] sm:$0xf]
    %v213 = vld [vmem:[#allocation5 + $0xc] sm:$0xf]
    %v214 = vld [vmem:[#allocation5 + $0x10] sm:$0xf]
    %v215 = vld [vmem:[#allocation5 + $0x14] sm:$0xf]
    %v216 = vld [vmem:[#allocation5 + $0x18] sm:$0xf]
    %v217 = vld [vmem:[#allocation5 + $0x1c] sm:$0xf]
    %v218 = vld [vmem:[#allocation5 + $0x20] sm:$0xf]
    %v219 = vld [vmem:[#allocation5 + $0x24] sm:$0xf]
    %v220 = vld [vmem:[#allocation5 + $0x28] sm:$0xf]
    %v221 = vld [vmem:[#allocation5 + $0x2c] sm:$0xf]
    %v222 = vld [vmem:[#allocation5 + $0x30] sm:$0xf]
    %v223 = vld [vmem:[#allocation5 + $0x34] sm:$0xf]
    %v224 = vld [vmem:[#allocation5 + $0x38] sm:$0xf]
    %v225 = vld [vmem:[#allocation5 + $0x3c] sm:$0xf]
    %v234 = vunpack.c.l.b16 %v202
    %v235 = vunpack.c.l.b16 %v203
    %v236 = vunpack.c.l.b16 %v204
    %v237 = vunpack.c.l.b16 %v205
    %v238 = vunpack.c.l.b16 %v206
    %v239 = vunpack.c.l.b16 %v207
    %v240 = vunpack.c.l.b16 %v208
    %v241 = vunpack.c.l.b16 %v209
    %v242 = vpack.c.b16 %v235, %v234
    %v243 = vpack.c.b16 %v237, %v236
    %v244 = vpack.c.b16 %v239, %v238
    %v245 = vpack.c.b16 %v241, %v240
    %v266 = vunpack.c.l.b16 %v210
    %v267 = vunpack.c.l.b16 %v211
    %v268 = vunpack.c.l.b16 %v212
    %v269 = vunpack.c.l.b16 %v213
    %v270 = vunpack.c.l.b16 %v214
    %v271 = vunpack.c.l.b16 %v215
    %v272 = vunpack.c.l.b16 %v216
    %v273 = vunpack.c.l.b16 %v217
    %v274 = vunpack.c.l.b16 %v218
    %v275 = vunpack.c.l.b16 %v219
    %v276 = vunpack.c.l.b16 %v220
    %v277 = vunpack.c.l.b16 %v221
    %v278 = vunpack.c.l.b16 %v222
    %v279 = vunpack.c.l.b16 %v223
    %v280 = vunpack.c.l.b16 %v224
    %v281 = vunpack.c.l.b16 %v225
    %v282 = vpack.c.b16 %v267, %v266
    %v283 = vpack.c.b16 %v269, %v268
    %v284 = vpack.c.b16 %v271, %v270
    %v285 = vpack.c.b16 %v273, %v272
    %v286 = vpack.c.b16 %v275, %v274
    %v287 = vpack.c.b16 %v277, %v276
    %v288 = vpack.c.b16 %v279, %v278
    %v289 = vpack.c.b16 %v281, %v280
    %298 = vmatpush.bf16.msra.mxu0 %v289
    %299 = vmatpush.bf16.msra.mxu0 %v288
    %300 = vmatpush.bf16.msra.mxu0 %v287
    %301 = vmatpush.bf16.msra.mxu0 %v286
    %302 = vmatpush.bf16.msra.mxu0 %v285
    %303 = vmatpush.bf16.msra.mxu0 %v284
    %304 = vmatpush.bf16.msra.mxu0 %v283
    %305 = vmatpush.bf16.msra.mxu0 %v282
    %306 = vmatmul.bf16.gmra.mxu0 %v242
    %v307 = vpop.f32.mrf.mxu0
    %v308 = vadd.f32 0.0, %v307
    %v309 = vpop.f32.mrf.mxu0
    %v310 = vadd.f32 0.0, %v309
    %311 = vmatmul.bf16.gmra.mxu0 %v243
    %v312 = vpop.f32.mrf.mxu0
    %v313 = vadd.f32 0.0, %v312
    %v314 = vpop.f32.mrf.mxu0
    %v315 = vadd.f32 0.0, %v314
    %316 = vmatmul.bf16.gmra.mxu0 %v244
    %v317 = vpop.f32.mrf.mxu0
    %v318 = vadd.f32 0.0, %v317
    %v319 = vpop.f32.mrf.mxu0
    %v320 = vadd.f32 0.0, %v319
    %321 = vmatmul.bf16.gmra.mxu0 %v245
    %v322 = vpop.f32.mrf.mxu0
    %v323 = vadd.f32 0.0, %v322
    %v324 = vpop.f32.mrf.mxu0
    %v325 = vadd.f32 0.0, %v324
    %326 = vdwg.mxu0
    %v327 = vpack.c.bf16 %v310, %v308
    %v328 = vpack.c.bf16 %v315, %v313
    %v329 = vpack.c.bf16 %v320, %v318
    %v330 = vpack.c.bf16 %v325, %v323
    %v331 = vld [vmem:[#allocation8] sm:$0xff]
    %v332 = vld [vmem:[#allocation8 + $0x8] sm:$0xf]
    %v333 = vld [vmem:[#allocation8 + $0xc] sm:$0xff]
    %v334 = vld [vmem:[#allocation8 + $0x14] sm:$0xf]
    %v335 = vld [vmem:[#allocation8 + $0x18] sm:$0xff]
    %v336 = vld [vmem:[#allocation8 + $0x20] sm:$0xf]
    %v337 = vld [vmem:[#allocation8 + $0x24] sm:$0xff]
    %v338 = vld [vmem:[#allocation8 + $0x2c] sm:$0xf]
    %v339 = vld [vmem:[#allocation8 + $0x30] sm:$0xff]
    %v340 = vld [vmem:[#allocation8 + $0x38] sm:$0xf]
    %v341 = vld [vmem:[#allocation8 + $0x3c] sm:$0xff]
    %v342 = vld [vmem:[#allocation8 + $0x44] sm:$0xf]
    %v343 = vld [vmem:[#allocation8 + $0x48] sm:$0xff]
    %v344 = vld [vmem:[#allocation8 + $0x50] sm:$0xf]
    %v345 = vld [vmem:[#allocation8 + $0x54] sm:$0xff]
    %v346 = vld [vmem:[#allocation8 + $0x5c] sm:$0xf]
    %v347 = vld [vmem:[#allocation8 + $0x60] sm:$0xff]
    %v348 = vld [vmem:[#allocation8 + $0x68] sm:$0xf]
    %v349 = vld [vmem:[#allocation8 + $0x6c] sm:$0xff]
    %v350 = vld [vmem:[#allocation8 + $0x74] sm:$0xf]
    %v351 = vld [vmem:[#allocation8 + $0x78] sm:$0xff]
    %v352 = vld [vmem:[#allocation8 + $0x80] sm:$0xf]
    %v353 = vld [vmem:[#allocation8 + $0x84] sm:$0xff]
    %v354 = vld [vmem:[#allocation8 + $0x8c] sm:$0xf]
    %v355 = vld [vmem:[#allocation8 + $0x90] sm:$0xff]
    %v356 = vld [vmem:[#allocation8 + $0x98] sm:$0xf]
    %v357 = vld [vmem:[#allocation8 + $0x9c] sm:$0xff]
    %v358 = vld [vmem:[#allocation8 + $0xa4] sm:$0xf]
    %v359 = vld [vmem:[#allocation8 + $0xa8] sm:$0xff]
    %v360 = vld [vmem:[#allocation8 + $0xb0] sm:$0xf]
    %v361 = vld [vmem:[#allocation8 + $0xb4] sm:$0xff]
    %v362 = vld [vmem:[#allocation8 + $0xbc] sm:$0xf]
    %v363 = vld [vmem:[%s6] sm:$0x7]
    %v365 = vperm.slane %v363, 0
    %v366 = vperm.slane %v363, 1
    %v367 = vperm.slane %v363, 2
    %v403 = vunpack.c.l.b16 %v331
    %v404 = vunpack.c.h.b16 %v331
    %v405 = vunpack.c.l.b16 %v332
    %v406 = vunpack.c.l.b16 %v333
    %v407 = vunpack.c.h.b16 %v333
    %v408 = vunpack.c.l.b16 %v334
    %v409 = vunpack.c.l.b16 %v335
    %v410 = vunpack.c.h.b16 %v335
    %v411 = vunpack.c.l.b16 %v336
    %v412 = vunpack.c.l.b16 %v337
    %v413 = vunpack.c.h.b16 %v337
    %v414 = vunpack.c.l.b16 %v338
    %v415 = vunpack.c.l.b16 %v339
    %v416 = vunpack.c.h.b16 %v339
    %v417 = vunpack.c.l.b16 %v340
    %v418 = vunpack.c.l.b16 %v341
    %v419 = vunpack.c.h.b16 %v341
    %v420 = vunpack.c.l.b16 %v342
    %v421 = vunpack.c.l.b16 %v343
    %v422 = vunpack.c.h.b16 %v343
    %v423 = vunpack.c.l.b16 %v344
    %v424 = vunpack.c.l.b16 %v345
    %v425 = vunpack.c.h.b16 %v345
    %v426 = vunpack.c.l.b16 %v346
    %v427 = vunpack.c.l.b16 %v347
    %v428 = vunpack.c.h.b16 %v347
    %v429 = vunpack.c.l.b16 %v348
    %v430 = vunpack.c.l.b16 %v349
    %v431 = vunpack.c.h.b16 %v349
    %v432 = vunpack.c.l.b16 %v350
    %v433 = vunpack.c.l.b16 %v351
    %v434 = vunpack.c.h.b16 %v351
    %v435 = vunpack.c.l.b16 %v352
    %v436 = vunpack.c.l.b16 %v353
    %v437 = vunpack.c.h.b16 %v353
    %v438 = vunpack.c.l.b16 %v354
    %v439 = vunpack.c.l.b16 %v355
    %v440 = vunpack.c.h.b16 %v355
    %v441 = vunpack.c.l.b16 %v356
    %v442 = vunpack.c.l.b16 %v357
    %v443 = vunpack.c.h.b16 %v357
    %v444 = vunpack.c.l.b16 %v358
    %v445 = vunpack.c.l.b16 %v359
    %v446 = vunpack.c.h.b16 %v359
    %v447 = vunpack.c.l.b16 %v360
    %v448 = vunpack.c.l.b16 %v361
    %v449 = vunpack.c.h.b16 %v361
    %v450 = vunpack.c.l.b16 %v362
    %v451 = vpack.c.b16 %v406, %v403
    %v452 = vpack.c.b16 %v407, %v404
    %v453 = vpack.c.b16 %v408, %v405
    %v454 = vpack.c.b16 %v412, %v409
    %v455 = vpack.c.b16 %v413, %v410
    %v456 = vpack.c.b16 %v414, %v411
    %v457 = vpack.c.b16 %v418, %v415
    %v458 = vpack.c.b16 %v419, %v416
    %v459 = vpack.c.b16 %v420, %v417
    %v460 = vpack.c.b16 %v424, %v421
    %v461 = vpack.c.b16 %v425, %v422
    %v462 = vpack.c.b16 %v426, %v423
    %v463 = vpack.c.b16 %v430, %v427
    %v464 = vpack.c.b16 %v431, %v428
    %v465 = vpack.c.b16 %v432, %v429
    %v466 = vpack.c.b16 %v436, %v433
    %v467 = vpack.c.b16 %v437, %v434
    %v468 = vpack.c.b16 %v438, %v435
    %v469 = vpack.c.b16 %v442, %v439
    %v470 = vpack.c.b16 %v443, %v440
    %v471 = vpack.c.b16 %v444, %v441
    %v472 = vpack.c.b16 %v448, %v445
    %v473 = vpack.c.b16 %v449, %v446
    %v474 = vpack.c.b16 %v450, %v447
    %499 = vmatpush.bf16.msra.mxu0 %v472
    %500 = vmatpush.bf16.msra.mxu0 %v469
    %501 = vmatpush.bf16.msra.mxu0 %v466
    %502 = vmatpush.bf16.msra.mxu0 %v463
    %503 = vmatpush.bf16.msra.mxu0 %v460
    %504 = vmatpush.bf16.msra.mxu0 %v457
    %505 = vmatpush.bf16.msra.mxu0 %v454
    %506 = vmatpush.bf16.msra.mxu0 %v451
    %507 = vmatmul.bf16.gmra.mxu0 %v327
    %v508 = vpop.f32.mrf.mxu0
    %v509 = vadd.f32 %v365, %v508
    %v510 = vpop.f32.mrf.mxu0
    %v511 = vadd.f32 %v365, %v510
    %512 = vmatmul.bf16.gmra.mxu0 %v328
    %v513 = vpop.f32.mrf.mxu0
    %v514 = vadd.f32 %v365, %v513
    %v515 = vpop.f32.mrf.mxu0
    %v516 = vadd.f32 %v365, %v515
    %517 = vmatmul.bf16.gmra.mxu0 %v329
    %v518 = vpop.f32.mrf.mxu0
    %v519 = vadd.f32 %v365, %v518
    %v520 = vpop.f32.mrf.mxu0
    %v521 = vadd.f32 %v365, %v520
    %522 = vmatmul.bf16.gmra.mxu0 %v330
    %v523 = vpop.f32.mrf.mxu0
    %v524 = vadd.f32 %v365, %v523
    %v525 = vpop.f32.mrf.mxu0
    %v526 = vadd.f32 %v365, %v525
    %527 = vdwg.mxu0
    %528 = vmatpush.bf16.msra.mxu0 %v473
    %529 = vmatpush.bf16.msra.mxu0 %v470
    %530 = vmatpush.bf16.msra.mxu0 %v467
    %531 = vmatpush.bf16.msra.mxu0 %v464
    %532 = vmatpush.bf16.msra.mxu0 %v461
    %533 = vmatpush.bf16.msra.mxu0 %v458
    %534 = vmatpush.bf16.msra.mxu0 %v455
    %535 = vmatpush.bf16.msra.mxu0 %v452
    %536 = vmatmul.bf16.gmra.mxu0 %v327
    %v537 = vpop.f32.mrf.mxu0
    %v538 = vadd.f32 %v366, %v537
    %v539 = vpop.f32.mrf.mxu0
    %v540 = vadd.f32 %v366, %v539
    %541 = vmatmul.bf16.gmra.mxu0 %v328
    %v542 = vpop.f32.mrf.mxu0
    %v543 = vadd.f32 %v366, %v542
    %v544 = vpop.f32.mrf.mxu0
    %v545 = vadd.f32 %v366, %v544
    %546 = vmatmul.bf16.gmra.mxu0 %v329
    %v547 = vpop.f32.mrf.mxu0
    %v548 = vadd.f32 %v366, %v547
    %v549 = vpop.f32.mrf.mxu0
    %v550 = vadd.f32 %v366, %v549
    %551 = vmatmul.bf16.gmra.mxu0 %v330
    %v552 = vpop.f32.mrf.mxu0
    %v553 = vadd.f32 %v366, %v552
    %v554 = vpop.f32.mrf.mxu0
    %v555 = vadd.f32 %v366, %v554
    %556 = vdwg.mxu0
    %557 = vmatpush.bf16.msra.mxu0 %v474
    %558 = vmatpush.bf16.msra.mxu0 %v471
    %559 = vmatpush.bf16.msra.mxu0 %v468
    %560 = vmatpush.bf16.msra.mxu0 %v465
    %561 = vmatpush.bf16.msra.mxu0 %v462
    %562 = vmatpush.bf16.msra.mxu0 %v459
    %563 = vmatpush.bf16.msra.mxu0 %v456
    %564 = vmatpush.bf16.msra.mxu0 %v453
    %565 = vmatmul.bf16.gmra.mxu0 %v327
    %v566 = vpop.f32.mrf.mxu0
    %v567 = vadd.f32 %v367, %v566
    %v568 = vpop.f32.mrf.mxu0
    %v569 = vadd.f32 %v367, %v568
    %570 = vmatmul.bf16.gmra.mxu0 %v328
    %v571 = vpop.f32.mrf.mxu0
    %v572 = vadd.f32 %v367, %v571
    %v573 = vpop.f32.mrf.mxu0
    %v574 = vadd.f32 %v367, %v573
    %575 = vmatmul.bf16.gmra.mxu0 %v329
    %v576 = vpop.f32.mrf.mxu0
    %v577 = vadd.f32 %v367, %v576
    %v578 = vpop.f32.mrf.mxu0
    %v579 = vadd.f32 %v367, %v578
    %580 = vmatmul.bf16.gmra.mxu0 %v330
    %v581 = vpop.f32.mrf.mxu0
    %v582 = vadd.f32 %v367, %v581
    %v583 = vpop.f32.mrf.mxu0
    %v584 = vadd.f32 %v367, %v583
    %585 = vdwg.mxu0
    %586 = vst [vmem:[#allocation2] sm:$0xff] %v509
    %587 = vst [vmem:[#allocation2 + $0x8] sm:$0xff] %v538
    %588 = vst [vmem:[#allocation2 + $0x10] sm:$0xff] %v567
    %589 = vst [vmem:[#allocation2 + $0x18] sm:$0xff] %v511
    %590 = vst [vmem:[#allocation2 + $0x20] sm:$0xff] %v540
    %591 = vst [vmem:[#allocation2 + $0x28] sm:$0xff] %v569
    %592 = vst [vmem:[#allocation2 + $0x30] sm:$0xff] %v514
    %593 = vst [vmem:[#allocation2 + $0x38] sm:$0xff] %v543
    %594 = vst [vmem:[#allocation2 + $0x40] sm:$0xff] %v572
    %595 = vst [vmem:[#allocation2 + $0x48] sm:$0xff] %v516
    %596 = vst [vmem:[#allocation2 + $0x50] sm:$0xff] %v545
    %597 = vst [vmem:[#allocation2 + $0x58] sm:$0xff] %v574
    %598 = vst [vmem:[#allocation2 + $0x60] sm:$0xff] %v519
    %599 = vst [vmem:[#allocation2 + $0x68] sm:$0xff] %v548
    %600 = vst [vmem:[#allocation2 + $0x70] sm:$0xff] %v577
    %601 = vst [vmem:[#allocation2 + $0x78] sm:$0xff] %v521
    %602 = vst [vmem:[#allocation2 + $0x80] sm:$0xff] %v550
    %603 = vst [vmem:[#allocation2 + $0x88] sm:$0xff] %v579
    %604 = vst [vmem:[#allocation2 + $0x90] sm:$0xff] %v524
    %605 = vst [vmem:[#allocation2 + $0x98] sm:$0xff] %v553
    %606 = vst [vmem:[#allocation2 + $0xa0] sm:$0xff] %v582
    %607 = vst [vmem:[#allocation2 + $0xa8] sm:$0xff] %v526
    %608 = vst [vmem:[#allocation2 + $0xb0] sm:$0xff] %v555
    %609 = vst [vmem:[#allocation2 + $0xb8] sm:$0xff] %v584
    %v610 = vld [vmem:[%s2] sm:$0xff]
    %v611 = vld [vmem:[%s7] sm:$0x1]
    %s612 = sld [smem:[#allocation4]]
    // While loop
    $region66: #{tpu_custom_call.1} parent=1 // loop_pre_header
      _
    $region67: #{tpu_custom_call.1} parent=1 // loop_header
      %s614 = sphi 0, %s616
      %p615 = scmp.ge.s32.totalorder %s614, %s612
      %v619 = vphi 0.0, %v884
    $region68: #{tpu_custom_call.1} parent=1 // loop_header_branch
      %618 = sbr.rel (%p615) target = $region72
    $region69: #{tpu_custom_call.1} parent=1 // loop_body
      %s620 = smul.u32 %s614, 3
      %s621 = smul.addr %s620, 8
      %s622 = scalar_lea.vmem [#allocation2], %s621
      %v623 = vld [vmem:[%s622] sm:$0xff]
      %v624 = vld [vmem:[%s622 + $0x8] sm:$0xff]
      %v625 = vld [vmem:[%s622 + $0x10] sm:$0xff]
      %v626 = vpack.c.bf16 %v619, %v619
      %v627 = vld [vmem:[#allocation10] sm:$0xff]
      %v628 = vld [vmem:[#allocation10 + $0x8] sm:$0xf]
      %v629 = vld [vmem:[#allocation10 + $0xc] sm:$0xff]
      %v630 = vld [vmem:[#allocation10 + $0x14] sm:$0xf]
      %v631 = vld [vmem:[#allocation10 + $0x18] sm:$0xff]
      %v632 = vld [vmem:[#allocation10 + $0x20] sm:$0xf]
      %v633 = vld [vmem:[#allocation10 + $0x24] sm:$0xff]
      %v634 = vld [vmem:[#allocation10 + $0x2c] sm:$0xf]
      %v635 = vld [vmem:[#allocation10 + $0x30] sm:$0xff]
      %v636 = vld [vmem:[#allocation10 + $0x38] sm:$0xf]
      %v637 = vld [vmem:[#allocation10 + $0x3c] sm:$0xff]
      %v638 = vld [vmem:[#allocation10 + $0x44] sm:$0xf]
      %v639 = vld [vmem:[#allocation10 + $0x48] sm:$0xff]
      %v640 = vld [vmem:[#allocation10 + $0x50] sm:$0xf]
      %v641 = vld [vmem:[#allocation10 + $0x54] sm:$0xff]
      %v642 = vld [vmem:[#allocation10 + $0x5c] sm:$0xf]
      %v643 = vld [vmem:[#allocation10 + $0x60] sm:$0xff]
      %v644 = vld [vmem:[#allocation10 + $0x68] sm:$0xf]
      %v645 = vld [vmem:[#allocation10 + $0x6c] sm:$0xff]
      %v646 = vld [vmem:[#allocation10 + $0x74] sm:$0xf]
      %v647 = vld [vmem:[#allocation10 + $0x78] sm:$0xff]
      %v648 = vld [vmem:[#allocation10 + $0x80] sm:$0xf]
      %v649 = vld [vmem:[#allocation10 + $0x84] sm:$0xff]
      %v650 = vld [vmem:[#allocation10 + $0x8c] sm:$0xf]
      %v651 = vld [vmem:[#allocation10 + $0x90] sm:$0xff]
      %v652 = vld [vmem:[#allocation10 + $0x98] sm:$0xf]
      %v653 = vld [vmem:[#allocation10 + $0x9c] sm:$0xff]
      %v654 = vld [vmem:[#allocation10 + $0xa4] sm:$0xf]
      %v655 = vld [vmem:[#allocation10 + $0xa8] sm:$0xff]
      %v656 = vld [vmem:[#allocation10 + $0xb0] sm:$0xf]
      %v657 = vld [vmem:[#allocation10 + $0xb4] sm:$0xff]
      %v658 = vld [vmem:[#allocation10 + $0xbc] sm:$0xf]
      %v691 = vunpack.c.l.b16 %v627
      %v692 = vunpack.c.h.b16 %v627
      %v693 = vunpack.c.l.b16 %v628
      %v694 = vunpack.c.l.b16 %v629
      %v695 = vunpack.c.h.b16 %v629
      %v696 = vunpack.c.l.b16 %v630
      %v697 = vunpack.c.l.b16 %v631
      %v698 = vunpack.c.h.b16 %v631
      %v699 = vunpack.c.l.b16 %v632
      %v700 = vunpack.c.l.b16 %v633
      %v701 = vunpack.c.h.b16 %v633
      %v702 = vunpack.c.l.b16 %v634
      %v703 = vunpack.c.l.b16 %v635
      %v704 = vunpack.c.h.b16 %v635
      %v705 = vunpack.c.l.b16 %v636
      %v706 = vunpack.c.l.b16 %v637
      %v707 = vunpack.c.h.b16 %v637
      %v708 = vunpack.c.l.b16 %v638
      %v709 = vunpack.c.l.b16 %v639
      %v710 = vunpack.c.h.b16 %v639
      %v711 = vunpack.c.l.b16 %v640
      %v712 = vunpack.c.l.b16 %v641
      %v713 = vunpack.c.h.b16 %v641
      %v714 = vunpack.c.l.b16 %v642
      %v715 = vunpack.c.l.b16 %v643
      %v716 = vunpack.c.h.b16 %v643
      %v717 = vunpack.c.l.b16 %v644
      %v718 = vunpack.c.l.b16 %v645
      %v719 = vunpack.c.h.b16 %v645
      %v720 = vunpack.c.l.b16 %v646
      %v721 = vunpack.c.l.b16 %v647
      %v722 = vunpack.c.h.b16 %v647
      %v723 = vunpack.c.l.b16 %v648
      %v724 = vunpack.c.l.b16 %v649
      %v725 = vunpack.c.h.b16 %v649
      %v726 = vunpack.c.l.b16 %v650
      %v727 = vunpack.c.l.b16 %v651
      %v728 = vunpack.c.h.b16 %v651
      %v729 = vunpack.c.l.b16 %v652
      %v730 = vunpack.c.l.b16 %v653
      %v731 = vunpack.c.h.b16 %v653
      %v732 = vunpack.c.l.b16 %v654
      %v733 = vunpack.c.l.b16 %v655
      %v734 = vunpack.c.h.b16 %v655
      %v735 = vunpack.c.l.b16 %v656
      %v736 = vunpack.c.l.b16 %v657
      %v737 = vunpack.c.h.b16 %v657
      %v738 = vunpack.c.l.b16 %v658
      %v739 = vpack.c.b16 %v694, %v691
      %v740 = vpack.c.b16 %v695, %v692
      %v741 = vpack.c.b16 %v696, %v693
      %v742 = vpack.c.b16 %v700, %v697
      %v743 = vpack.c.b16 %v701, %v698
      %v744 = vpack.c.b16 %v702, %v699
      %v745 = vpack.c.b16 %v706, %v703
      %v746 = vpack.c.b16 %v707, %v704
      %v747 = vpack.c.b16 %v708, %v705
      %v748 = vpack.c.b16 %v712, %v709
      %v749 = vpack.c.b16 %v713, %v710
      %v750 = vpack.c.b16 %v714, %v711
      %v751 = vpack.c.b16 %v718, %v715
      %v752 = vpack.c.b16 %v719, %v716
      %v753 = vpack.c.b16 %v720, %v717
      %v754 = vpack.c.b16 %v724, %v721
      %v755 = vpack.c.b16 %v725, %v722
      %v756 = vpack.c.b16 %v726, %v723
      %v757 = vpack.c.b16 %v730, %v727
      %v758 = vpack.c.b16 %v731, %v728
      %v759 = vpack.c.b16 %v732, %v729
      %v760 = vpack.c.b16 %v736, %v733
      %v761 = vpack.c.b16 %v737, %v734
      %v762 = vpack.c.b16 %v738, %v735
      %787 = vmatpush.bf16.msra.mxu0 %v760
      %788 = vmatpush.bf16.msra.mxu0 %v757
      %789 = vmatpush.bf16.msra.mxu0 %v754
      %790 = vmatpush.bf16.msra.mxu0 %v751
      %791 = vmatpush.bf16.msra.mxu0 %v748
      %792 = vmatpush.bf16.msra.mxu0 %v745
      %793 = vmatpush.bf16.msra.mxu0 %v742
      %794 = vmatpush.bf16.msra.mxu0 %v739
      %795 = vmatmul.bf16.gmra.mxu0 %v626
      %v796 = vpop.f32.mrf.mxu0
      %v797 = vadd.f32 0.0, %v796
      %v798 = vpop.f32.mrf.mxu0
      %799 = vdwg.mxu0
      %800 = vmatpush.bf16.msra.mxu0 %v761
      %801 = vmatpush.bf16.msra.mxu0 %v758
      %802 = vmatpush.bf16.msra.mxu0 %v755
      %803 = vmatpush.bf16.msra.mxu0 %v752
      %804 = vmatpush.bf16.msra.mxu0 %v749
      %805 = vmatpush.bf16.msra.mxu0 %v746
      %806 = vmatpush.bf16.msra.mxu0 %v743
      %807 = vmatpush.bf16.msra.mxu0 %v740
      %808 = vmatmul.bf16.gmra.mxu0 %v626
      %v809 = vpop.f32.mrf.mxu0
      %v810 = vadd.f32 0.0, %v809
      %v811 = vpop.f32.mrf.mxu0
      %812 = vdwg.mxu0
      %813 = vmatpush.bf16.msra.mxu0 %v762
      %814 = vmatpush.bf16.msra.mxu0 %v759
      %815 = vmatpush.bf16.msra.mxu0 %v756
      %816 = vmatpush.bf16.msra.mxu0 %v753
      %817 = vmatpush.bf16.msra.mxu0 %v750
      %818 = vmatpush.bf16.msra.mxu0 %v747
      %819 = vmatpush.bf16.msra.mxu0 %v744
      %820 = vmatpush.bf16.msra.mxu0 %v741
      %821 = vmatmul.bf16.gmra.mxu0 %v626
      %v822 = vpop.f32.mrf.mxu0
      %v823 = vadd.f32 0.0, %v822
      %v824 = vpop.f32.mrf.mxu0
      %825 = vdwg.mxu0
      %v826 = vadd.f32 %v623, %v797
      %v827 = vxor.u32 %v826, 2147483648
      %v828 = vmul.f32 %v827, 1.442695
      %v829 = vpow.pop %v828
      %v830 = vadd.f32 %v829, 1.0
      %v831 = vrcp.pop %v830
      %v832 = vmul.f32 %v830, %v831
      %v833 = vsub.f32 1.0, %v832
      %v834 = vmul.f32 %v831, %v833
      %v835 = vadd.f32 %v831, %v834
      %vm836 = vweird.f32 %v830
      %vm837 = vweird.f32 %v831
      %vm838 = vmor %vm836, %vm837
      %v839 = vsel %vm838, %v831, %v835
      %v840 = vand.u32 2147483647, %v830
      %vm841 = vcmp.eq.f32.partialorder %v840, 8.507059e+37
      %v842 = vand.u32 %v830, 2147483648
      %v843 = vor.u32 1.1754944e-38, %v842
      %v844 = vsel %vm841, %v843, %v839
      %v845 = vmul.f32 1.0, %v844
      %v846 = vadd.f32 %v624, %v810
      %v847 = vxor.u32 %v846, 2147483648
      %v848 = vmul.f32 %v847, 1.442695
      %v849 = vpow.pop %v848
      %v850 = vadd.f32 %v849, 1.0
      %v851 = vrcp.pop %v850
      %v852 = vmul.f32 %v850, %v851
      %v853 = vsub.f32 1.0, %v852
      %v854 = vmul.f32 %v851, %v853
      %v855 = vadd.f32 %v851, %v854
      %vm856 = vweird.f32 %v850
      %vm857 = vweird.f32 %v851
      %vm858 = vmor %vm856, %vm857
      %v859 = vsel %vm858, %v851, %v855
      %v860 = vand.u32 2147483647, %v850
      %vm861 = vcmp.eq.f32.partialorder %v860, 8.507059e+37
      %v862 = vand.u32 %v850, 2147483648
      %v863 = vor.u32 1.1754944e-38, %v862
      %v864 = vsel %vm861, %v863, %v859
      %v865 = vmul.f32 1.0, %v864
      %v867 = vperm.slane %v611, 0
      %v869 = vadd.f32 %v823, %v867
      %v870 = vmul.f32 %v845, %v869
      %v871 = vadd.f32 %v625, %v870
      %v872 = vtanh.pop %v871
      %v873 = vsub.f32 1.0, %v865
      %v874 = vmul.f32 %v873, %v872
      %v875 = vmul.f32 %v865, %v619
      %v876 = vadd.f32 %v874, %v875
      %v877 = vstv %s614
      %vm878 = vcmp.lt.s32.totalorder %v877, %v610
      %v879 = vsel %vm878, 1, 0
      %880 = vset.pattern.permute.xlu0 0
      %881 = vperm.xlu0 %880, %v879
      %v882 = vpop.permute.xlu0 %881
      %vm883 = vcmp.eq.s32.totalorder %v882, 1
      %v884 = vsel %vm883, %v876, %v619
    $region70: #{tpu_custom_call.1} parent=1 // loop_footer
      %s616 = sadd.s32 %s614, 1
    $region71: #{tpu_custom_call.1} parent=1 // loop_footer_branch
      %613 = sbr.rel target = $region67
    $region72: #{tpu_custom_call.1} parent=1 // loop_exit
      _
    %v885 = vpack.c.bf16 %v619, %v619
    %v886 = vld [vmem:[#allocation11] sm:$0xf]
    %v887 = vld [vmem:[#allocation11 + $0x4] sm:$0xf]
    %v888 = vld [vmem:[#allocation11 + $0x8] sm:$0xf]
    %v889 = vld [vmem:[#allocation11 + $0xc] sm:$0xf]
    %v890 = vld [vmem:[#allocation11 + $0x10] sm:$0xf]
    %v891 = vld [vmem:[#allocation11 + $0x14] sm:$0xf]
    %v892 = vld [vmem:[#allocation11 + $0x18] sm:$0xf]
    %v893 = vld [vmem:[#allocation11 + $0x1c] sm:$0xf]
    %v894 = vld [vmem:[#allocation11 + $0x20] sm:$0xf]
    %v895 = vld [vmem:[#allocation11 + $0x24] sm:$0xf]
    %v896 = vld [vmem:[#allocation11 + $0x28] sm:$0xf]
    %v897 = vld [vmem:[#allocation11 + $0x2c] sm:$0xf]
    %v898 = vld [vmem:[#allocation11 + $0x30] sm:$0xf]
    %v899 = vld [vmem:[#allocation11 + $0x34] sm:$0xf]
    %v900 = vld [vmem:[#allocation11 + $0x38] sm:$0xf]
    %v901 = vld [vmem:[#allocation11 + $0x3c] sm:$0xf]
    %v902 = vld [vmem:[%s9] sm:$0x1]
    %v904 = vperm.slane %v902, 0
    %v922 = vunpack.c.l.b16 %v886
    %v923 = vunpack.c.l.b16 %v887
    %v924 = vunpack.c.l.b16 %v888
    %v925 = vunpack.c.l.b16 %v889
    %v926 = vunpack.c.l.b16 %v890
    %v927 = vunpack.c.l.b16 %v891
    %v928 = vunpack.c.l.b16 %v892
    %v929 = vunpack.c.l.b16 %v893
    %v930 = vunpack.c.l.b16 %v894
    %v931 = vunpack.c.l.b16 %v895
    %v932 = vunpack.c.l.b16 %v896
    %v933 = vunpack.c.l.b16 %v897
    %v934 = vunpack.c.l.b16 %v898
    %v935 = vunpack.c.l.b16 %v899
    %v936 = vunpack.c.l.b16 %v900
    %v937 = vunpack.c.l.b16 %v901
    %v938 = vpack.c.b16 %v923, %v922
    %v939 = vpack.c.b16 %v925, %v924
    %v940 = vpack.c.b16 %v927, %v926
    %v941 = vpack.c.b16 %v929, %v928
    %v942 = vpack.c.b16 %v931, %v930
    %v943 = vpack.c.b16 %v933, %v932
    %v944 = vpack.c.b16 %v935, %v934
    %v945 = vpack.c.b16 %v937, %v936
    %954 = vmatpush.bf16.msra.mxu0 %v945
    %955 = vmatpush.bf16.msra.mxu0 %v944
    %956 = vmatpush.bf16.msra.mxu0 %v943
    %957 = vmatpush.bf16.msra.mxu0 %v942
    %958 = vmatpush.bf16.msra.mxu0 %v941
    %959 = vmatpush.bf16.msra.mxu0 %v940
    %960 = vmatpush.bf16.msra.mxu0 %v939
    %961 = vmatpush.bf16.msra.mxu0 %v938
    %962 = vmatmul.bf16.gmra.mxu0 %v885
    %v963 = vpop.f32.mrf.mxu0
    %v964 = vadd.f32 %v904, %v963
    %v965 = vpop.f32.mrf.mxu0
    %966 = vdwg.mxu0
    %v967 = vmax.f32 %v964, 0.0
    %v968 = vpack.c.bf16 %v967, %v967
    %v969 = vld [vmem:[#allocation13] sm:$0xf]
    %v970 = vld [vmem:[#allocation13 + $0x4] sm:$0xf]
    %v971 = vld [vmem:[#allocation13 + $0x8] sm:$0xf]
    %v972 = vld [vmem:[#allocation13 + $0xc] sm:$0xf]
    %v973 = vld [vmem:[#allocation13 + $0x10] sm:$0xf]
    %v974 = vld [vmem:[#allocation13 + $0x14] sm:$0xf]
    %v975 = vld [vmem:[#allocation13 + $0x18] sm:$0xf]
    %v976 = vld [vmem:[#allocation13 + $0x1c] sm:$0xf]
    %v977 = vld [vmem:[#allocation13 + $0x20] sm:$0xf]
    %v978 = vld [vmem:[#allocation13 + $0x24] sm:$0xf]
    %v979 = vld [vmem:[#allocation13 + $0x28] sm:$0xf]
    %v980 = vld [vmem:[#allocation13 + $0x2c] sm:$0xf]
    %v981 = vld [vmem:[#allocation13 + $0x30] sm:$0xf]
    %v982 = vld [vmem:[#allocation13 + $0x34] sm:$0xf]
    %v983 = vld [vmem:[#allocation13 + $0x38] sm:$0xf]
    %v984 = vld [vmem:[#allocation13 + $0x3c] sm:$0xf]
    %v985 = vld [vmem:[%s11] sm:$0x1]
    %v987 = vperm.slane %v985, 0
    %v1005 = vunpack.c.l.b16 %v969
    %v1006 = vunpack.c.l.b16 %v970
    %v1007 = vunpack.c.l.b16 %v971
    %v1008 = vunpack.c.l.b16 %v972
    %v1009 = vunpack.c.l.b16 %v973
    %v1010 = vunpack.c.l.b16 %v974
    %v1011 = vunpack.c.l.b16 %v975
    %v1012 = vunpack.c.l.b16 %v976
    %v1013 = vunpack.c.l.b16 %v977
    %v1014 = vunpack.c.l.b16 %v978
    %v1015 = vunpack.c.l.b16 %v979
    %v1016 = vunpack.c.l.b16 %v980
    %v1017 = vunpack.c.l.b16 %v981
    %v1018 = vunpack.c.l.b16 %v982
    %v1019 = vunpack.c.l.b16 %v983
    %v1020 = vunpack.c.l.b16 %v984
    %v1021 = vpack.c.b16 %v1006, %v1005
    %v1022 = vpack.c.b16 %v1008, %v1007
    %v1023 = vpack.c.b16 %v1010, %v1009
    %v1024 = vpack.c.b16 %v1012, %v1011
    %v1025 = vpack.c.b16 %v1014, %v1013
    %v1026 = vpack.c.b16 %v1016, %v1015
    %v1027 = vpack.c.b16 %v1018, %v1017
    %v1028 = vpack.c.b16 %v1020, %v1019
    %1037 = vmatpush.bf16.msra.mxu0 %v1028
    %1038 = vmatpush.bf16.msra.mxu0 %v1027
    %1039 = vmatpush.bf16.msra.mxu0 %v1026
    %1040 = vmatpush.bf16.msra.mxu0 %v1025
    %1041 = vmatpush.bf16.msra.mxu0 %v1024
    %1042 = vmatpush.bf16.msra.mxu0 %v1023
    %1043 = vmatpush.bf16.msra.mxu0 %v1022
    %1044 = vmatpush.bf16.msra.mxu0 %v1021
    %1045 = vmatmul.bf16.gmra.mxu0 %v968
    %v1046 = vpop.f32.mrf.mxu0
    %v1047 = vadd.f32 %v987, %v1046
    %v1048 = vpop.f32.mrf.mxu0
    %1049 = vdwg.mxu0
    %v1050 = vmax.f32 %v1047, 0.0
    %1051 = vst [vmem:[#allocation14] sm:$0xff] %v1050
    // Predicated region
    $region73: #{tpu_custom_call.1} parent=1 // pred_check
      _
    $region74: #{tpu_custom_call.1} parent=1 // pred_check_branch
      %1053 = sbr.rel (0) target = $region76
    $region75: #{tpu_custom_call.1} parent=1 // pred_region
      %1055 = vsyncadd [#allocation7], 0
      %s1057 = sshll.u32 [#allocation14], 4
      %s1058 = int_to_ptr.vmem [resolvable:$true] %s1057
      %s1059 = sshll.u32 %s12, 4
      %s1060 = int_to_ptr.hbm [resolvable:$true] %s1059
      %1062 = dma.vmem_to_hbm [thread:$0]  %s1058, 128, %s1060, [#allocation7]
    $region76: #{tpu_custom_call.1} parent=1 // pred_fallthru
      _
    // Predicated region
    $region77: #{tpu_custom_call.1} parent=1 // pred_check
      _
    $region78: #{tpu_custom_call.1} parent=1 // pred_check_branch
      %1064 = sbr.rel (0) target = $region80
    $region79: #{tpu_custom_call.1} parent=1 // pred_region
      %1066 = dma.done [#allocation7], 128
    $region80: #{tpu_custom_call.1} parent=1 // pred_fallthru
      _
    %1067 = vsyncpa [#allocation6], 1
    %1068 = vsyncpa [#allocation9], 1
    %1069 = vsyncpa [#allocation12], 1
    %1070 = vsyncpa [#allocation7], 1

</llo_original>
